<compile_context>
chip_gen: v7x
topology: tpu7x:2x2x1
jax: 0.10.0
libtpu: 0.0.40
codegen_flags: <defaults>
</compile_context>

<pallas_src>
import functools

import jax
import jax.numpy as jnp
from jax import lax
from jax.experimental import pallas as pl
from jax.experimental.pallas import tpu as pltpu


_MXU_DTYPE = jnp.bfloat16      # native MXU operand dtype on v5e / v6e / v7x


# ----------------------------- kernels --------------------------------------

def _layernorm_kernel(x_ref, g_ref, b_ref, o_ref, *, eps):
    # x_ref: (TM, D)   g_ref/b_ref: (1, D)   o_ref: (TM, D)
    x = x_ref[...].astype(jnp.float32)
    mean = jnp.mean(x, axis=-1, keepdims=True)
    xc = x - mean
    var = jnp.mean(xc * xc, axis=-1, keepdims=True)
    inv = lax.rsqrt(var + eps)                             # EUP slot, ~free
    # single lane-dense full-width store
    o_ref[...] = (xc * inv * g_ref[...] + b_ref[...]).astype(o_ref.dtype)


def _prenorm_linear_kernel(x_ref, g_ref, wt_ref, beff_ref, o_ref, xhat_ref, *, eps):
    # grid = (row_tiles, dout_tiles); j (Dout) is the inner axis.
    # Normalize the row tile ONCE (at j == 0), cache bf16 x_hat * gamma in VMEM
    # scratch, and reuse it against every streamed weight column tile.
    #   x_ref:    (TM, D)        g_ref: (1, D) f32
    #   wt_ref:   (D, TN) bf16   beff_ref: (1, TN) f32    o_ref: (TM, TN)
    #   xhat_ref: (TM, D) bf16 scratch
    @pl.when(pl.program_id(1) == 0)
    def _():
        x = x_ref[...].astype(jnp.float32)
        mean = jnp.mean(x, axis=-1, keepdims=True)
        xc = x - mean
        var = jnp.mean(xc * xc, axis=-1, keepdims=True)
        xhat_ref[...] = (xc * lax.rsqrt(var + eps) * g_ref[...]).astype(xhat_ref.dtype)
    # bf16 x bf16 on the MXU, f32 accumulation.
    y = jnp.dot(xhat_ref[...], wt_ref[...], preferred_element_type=jnp.float32)
    o_ref[...] = (y + beff_ref[...]).astype(o_ref.dtype)   # one lane-dense store


# ----------------------------- tiling helpers --------------------------------

def _vmem_limit_bytes():
    """~3/4 of physical VMEM: 48 MiB on v7x, 96 MiB on v5e/v6e (capped)."""
    cap = 128 * 1024 * 1024
    try:
        info = pltpu.get_tpu_info()
        cap = int(getattr(info, "vmem_capacity_bytes", cap) or cap)
    except Exception:
        pass
    return min(96 * 1024 * 1024, (cap * 3) // 4)


def _row_tiling(P, max_tm):
    """Sublane-aligned row tile; prefers a tile that divides P exactly
    (no pad / slice HBM round trips) and keeps >= 2 grid steps for the two
    v7x TensorCores when there is enough work."""
    cap = max(8, min(int(max_tm), 1024))
    cap -= cap % 8
    if P >= 16:
        half = -(-P // 2)
        half = half - half % 8 if half >= 8 else 8
        cap = min(cap, max(8, half))
    # 1) exact divisor in [cap/2, cap]  ->  zero padding
    if P % 8 == 0:
        t = min(cap, P)
        floor = max(8, cap // 2)
        while t >= floor:
            if P % t == 0:
                return t, P
            t -= 8
    # 2) fall back: near-equal tiles, pad only the small remainder
    n_tiles = max(1, -(-P // cap))
    tm = max(8, ((-(-P // n_tiles) + 7) // 8) * 8)
    P_pad = -(-P // tm) * tm
    return tm, P_pad


def _col_tiling(Dout, cap=512):
    """Lane-dense (multiple-of-128) Dout tile that divides Dout."""
    if Dout <= cap:
        return Dout
    t = cap - cap % 128
    while t >= 128:
        if Dout % t == 0:
            return t
        t -= 128
    return Dout          # fall back to a resident full-width weight


# ----------------------------- wrappers --------------------------------------

def layernorm(x, gamma, beta, *, eps=1e-5):
    """LayerNorm over the last dim via a Pallas kernel.  x: (..., D)."""
    orig_shape = x.shape
    D = orig_shape[-1]
    x2 = x.reshape(-1, D)
    P = x2.shape[0]

    vmem = _vmem_limit_bytes()
    item = x.dtype.itemsize
    per_row = 2 * D * (item + item)                    # double-buffered in + out
    max_tm = max(8, (vmem * 3 // 4) // max(per_row, 1))
    tm, P_pad = _row_tiling(P, max_tm)
    padded = P_pad != P
    if padded:
        x2 = jnp.pad(x2, ((0, P_pad - P), (0, 0)))

    g = gamma.reshape(1, D).astype(jnp.float32)
    b = beta.reshape(1, D).astype(jnp.float32)

    cost = pl.CostEstimate(
        flops=8 * P_pad * D,
        transcendentals=P_pad,
        bytes_accessed=item * 2 * P_pad * D + 4 * 2 * D,
    )
    out = pl.pallas_call(
        functools.partial(_layernorm_kernel, eps=eps),
        out_shape=jax.ShapeDtypeStruct((P_pad, D), x.dtype),
        grid_spec=pltpu.PrefetchScalarGridSpec(
            num_scalar_prefetch=0,
            grid=(P_pad // tm,),
            in_specs=[
                pl.BlockSpec((tm, D), lambda i: (i, 0)),
                pl.BlockSpec((1, D), lambda i: (0, 0)),
                pl.BlockSpec((1, D), lambda i: (0, 0)),
            ],
            out_specs=pl.BlockSpec((tm, D), lambda i: (i, 0)),
        ),
        compiler_params=pltpu.CompilerParams(
            dimension_semantics=("parallel",),
            vmem_limit_bytes=vmem,
        ),
        cost_estimate=cost,
    )(x2, g, b)
    if padded:
        out = out[:P]
    return out.reshape(orig_shape)


def pre_norm(x, gamma, beta, fn, *, eps=1e-5, **kwargs):
    """Generic PreNorm: y = fn(LayerNorm(x), **kwargs).

    When `fn` starts with a projection (attention q/k/v, MLP up-proj), prefer
    `pre_norm_linear` with the (concatenated) projection weight so the
    normalized tensor never round-trips through HBM.
    """
    # TODO(synk): an arbitrary `fn` (attention / MLP / ...) has no generic
    # in-kernel equivalent; it runs as plain JAX on the Pallas-LayerNorm output.
    return fn(layernorm(x, gamma, beta, eps=eps), **kwargs)


def pre_norm_linear(x, gamma, beta, w, b, *, eps=1e-5):
    """Fused fast path for PreNorm(dim, nn.Linear(dim, dim_out)).

    w: (dim_out, dim) in PyTorch Linear layout, b: (dim_out,).
    Matmul runs in bf16 on the MXU with f32 accumulation.
    """
    orig_shape = x.shape
    D = orig_shape[-1]
    Dout = w.shape[0]
    x2 = x.reshape(-1, D)
    P = x2.shape[0]

    tn = _col_tiling(Dout)
    vmem = _vmem_limit_bytes()
    x_item = x.dtype.itemsize
    o_item = x_item
    w_item = jnp.dtype(_MXU_DTYPE).itemsize
    fixed = 2 * D * tn * w_item + 2 * tn * 4 + 2 * D * 4      # weight/beff/gamma bufs
    per_row = 2 * D * x_item + D * w_item + 2 * tn * o_item   # x(x2) + scratch + out(x2)
    budget = vmem * 3 // 4
    max_tm = max(8, (budget - fixed) // max(per_row, 1))
    tm, P_pad = _row_tiling(P, max_tm)
    padded = P_pad != P
    if padded:
        x2 = jnp.pad(x2, ((0, P_pad - P), (0, 0)))

    g = gamma.reshape(1, D).astype(jnp.float32)
    # Pass W^T directly in bf16 (gamma is applied in-kernel on the VPU — no
    # D*Dout HBM fold pass and no f32 weight copy).  Only fold the tiny
    # beta @ W^T + b term on the host.
    wt = jnp.transpose(w).astype(_MXU_DTYPE)                          # (D, Dout)
    beff = (beta.astype(jnp.float32) @ jnp.transpose(w).astype(jnp.float32)
            + b.astype(jnp.float32)).reshape(1, Dout)

    cost = pl.CostEstimate(
        flops=2 * P_pad * D * Dout + 8 * P_pad * D,
        transcendentals=P_pad,
        bytes_accessed=(x_item * P_pad * D + o_item * P_pad * Dout
                        + w_item * D * Dout + 4 * (D + Dout)),
    )
    out = pl.pallas_call(
        functools.partial(_prenorm_linear_kernel, eps=eps),
        out_shape=jax.ShapeDtypeStruct((P_pad, Dout), x.dtype),
        grid_spec=pltpu.PrefetchScalarGridSpec(
            num_scalar_prefetch=0,
            grid=(P_pad // tm, Dout // tn),
            in_specs=[
                pl.BlockSpec((tm, D), lambda i, j: (i, 0)),     # same block across j -> no re-DMA
                pl.BlockSpec((1, D), lambda i, j: (0, 0)),
                pl.BlockSpec((D, tn), lambda i, j: (0, j)),     # weight streamed over Dout
                pl.BlockSpec((1, tn), lambda i, j: (0, j)),
            ],
            out_specs=pl.BlockSpec((tm, tn), lambda i, j: (i, j)),
            scratch_shapes=[pltpu.VMEM((tm, D), _MXU_DTYPE)],   # cached x_hat * gamma
        ),
        compiler_params=pltpu.CompilerParams(
            dimension_semantics=("parallel", "arbitrary"),
            vmem_limit_bytes=vmem,
        ),
        cost_estimate=cost,
    )(x2, g, wt, beff)
    if padded:
        out = out[:P]
    return out.reshape(*orig_shape[:-1], Dout)


# ----------------------------- reference --------------------------------------

def layernorm_ref(x, gamma, beta, eps=1e-5):
    mean = jnp.mean(x, axis=-1, keepdims=True)
    var = jnp.mean((x - mean) ** 2, axis=-1, keepdims=True)
    return (x - mean) / jnp.sqrt(var + eps) * gamma + beta


# ----------------------------- demo / check -----------------------------------

if __name__ == "__main__":
    key = jax.random.PRNGKey(0)
    kx, kg, kb, kw, kbias = jax.random.split(key, 5)

    batch, seq, dim, dim_out = 2, 128, 256, 256      # small, lane-dense shapes
    x = jax.random.normal(kx, (batch, seq, dim), jnp.float32)
    gamma = 1.0 + 0.1 * jax.random.normal(kg, (dim,), jnp.float32)
    beta = 0.1 * jax.random.normal(kb, (dim,), jnp.float32)
    bound = (6.0 / (dim + dim_out)) ** 0.5
    w = jax.random.uniform(kw, (dim_out, dim), jnp.float32, -bound, bound)
    b = 0.1 * jax.random.normal(kbias, (dim_out,), jnp.float32)

    # 1) Generic PreNorm: arbitrary fn applied to the Pallas-LayerNorm output.
    fn = lambda y: jnp.tanh(y @ w.T + b)
    out_generic = jax.block_until_ready(pre_norm(x, gamma, beta, fn))
    ref_generic = fn(layernorm_ref(x, gamma, beta))
    assert out_generic.shape == (batch, seq, dim_out), out_generic.shape
    err_g = float(jnp.max(jnp.abs(out_generic - ref_generic)))
    assert err_g < 1e-3, err_g

    # 1b) LayerNorm-only, non-tile-aligned row count (exercises the pad path).
    x_odd = jax.random.normal(kx, (2, 100, dim), jnp.float32)
    out_odd = jax.block_until_ready(layernorm(x_odd, gamma, beta))
    err_o = float(jnp.max(jnp.abs(out_odd - layernorm_ref(x_odd, gamma, beta))))
    assert err_o < 1e-3, err_o

    # 2) Fused fast path: PreNorm(dim, Linear(dim, dim_out)) in ONE kernel.
    #    bf16 MXU operands + f32 accumulation -> a few e-2 max-abs vs f32 ref.
    out_fused = jax.block_until_ready(pre_norm_linear(x, gamma, beta, w, b))
    ref_fused = jnp.dot(layernorm_ref(x, gamma, beta), w.T,
                        precision=jax.lax.Precision.HIGHEST) + b
    assert out_fused.shape == (batch, seq, dim_out), out_fused.shape
    err_f = float(jnp.max(jnp.abs(out_fused - ref_fused)))
    assert err_f < 5e-2, err_f

    print("KERNEL_OK")
</pallas_src>

<mosaic_0001>
module attributes {stable_mosaic.version = 11 : i64} {
  func.func @_layernorm_kernel(%arg0: i32, %arg1: memref<128x256xf32, #tpu.memory_space<vmem>>, %arg2: memref<1x256xf32, #tpu.memory_space<vmem>>, %arg3: memref<1x256xf32, #tpu.memory_space<vmem>>, %arg4: memref<128x256xf32, #tpu.memory_space<vmem>>) attributes {dimension_semantics = [#tpu.dimension_semantics<parallel>], iteration_bounds = array<i64: 2>, scalar_prefetch = 0 : i64, scratch_operands = 0 : i64, tpu.core_type = #tpu.core_type<tc>, window_params = [{transform_indices = @transform_0, window_bounds = array<i64: 128, 256>}, {pipeline_mode = #tpu.pipeline_mode<synchronous>, transform_indices = @transform_1, window_bounds = array<i64: 1, 256>}, {pipeline_mode = #tpu.pipeline_mode<synchronous>, transform_indices = @transform_2, window_bounds = array<i64: 1, 256>}, {transform_indices = @transform_3, window_bounds = array<i64: 128, 256>}]} {
    %c0 = arith.constant 0 : index
    %c0_0 = arith.constant 0 : index
    %0 = vector.load %arg1[%c0, %c0_0] : memref<128x256xf32, #tpu.memory_space<vmem>>, vector<128x256xf32>
    %cst = arith.constant dense<0.000000e+00> : vector<128xf32>
    %1 = vector.multi_reduction <add>, %0, %cst [1] : vector<128x256xf32> to vector<128xf32>
    %2 = vector.shape_cast %1 : vector<128xf32> to vector<128x1xf32>
    %cst_1 = arith.constant 2.560000e+02 : f32
    %3 = vector.broadcast %cst_1 : f32 to vector<128x1xf32>
    %4 = arith.divf %2, %3 : vector<128x1xf32>
    %5 = vector.broadcast %4 : vector<128x1xf32> to vector<128x256xf32>
    %6 = arith.subf %0, %5 : vector<128x256xf32>
    %7 = arith.mulf %6, %6 : vector<128x256xf32>
    %cst_2 = arith.constant dense<0.000000e+00> : vector<128xf32>
    %8 = vector.multi_reduction <add>, %7, %cst_2 [1] : vector<128x256xf32> to vector<128xf32>
    %9 = vector.shape_cast %8 : vector<128xf32> to vector<128x1xf32>
    %cst_3 = arith.constant 2.560000e+02 : f32
    %10 = vector.broadcast %cst_3 : f32 to vector<128x1xf32>
    %11 = arith.divf %9, %10 : vector<128x1xf32>
    %cst_4 = arith.constant 9.99999974E-6 : f32
    %12 = vector.broadcast %cst_4 : f32 to vector<128x1xf32>
    %13 = arith.addf %11, %12 : vector<128x1xf32>
    %14 = math.rsqrt %13 : vector<128x1xf32>
    %15 = vector.broadcast %14 : vector<128x1xf32> to vector<128x256xf32>
    %16 = arith.mulf %6, %15 : vector<128x256xf32>
    %c0_5 = arith.constant 0 : index
    %c0_6 = arith.constant 0 : index
    %17 = vector.load %arg2[%c0_5, %c0_6] : memref<1x256xf32, #tpu.memory_space<vmem>>, vector<1x256xf32>
    %18 = vector.broadcast %17 : vector<1x256xf32> to vector<128x256xf32>
    %19 = arith.mulf %16, %18 : vector<128x256xf32>
    %c0_7 = arith.constant 0 : index
    %c0_8 = arith.constant 0 : index
    %20 = vector.load %arg3[%c0_7, %c0_8] : memref<1x256xf32, #tpu.memory_space<vmem>>, vector<1x256xf32>
    %21 = vector.broadcast %20 : vector<1x256xf32> to vector<128x256xf32>
    %22 = arith.addf %19, %21 : vector<128x256xf32>
    %c0_9 = arith.constant 0 : index
    %c0_10 = arith.constant 0 : index
    %23 = vector.load %arg4[%c0_9, %c0_10] : memref<128x256xf32, #tpu.memory_space<vmem>>, vector<128x256xf32>
    tpu.vector_store %arg4[%c0_9, %c0_10], %22 {strides = array<i32>} : memref<128x256xf32, #tpu.memory_space<vmem>>, vector<128x256xf32>,
    return
  }
  func.func @transform_0(%arg0: i32) -> (i32, i32) {
    %c0_i32 = arith.constant 0 : i32
    %c0_i32_0 = arith.constant 0 : i32
    return %arg0, %c0_i32 : i32, i32
  }
  func.func @transform_1(%arg0: i32) -> (i32, i32) {
    %c0_i32 = arith.constant 0 : i32
    %c0_i32_0 = arith.constant 0 : i32
    %c0_i32_1 = arith.constant 0 : i32
    return %c0_i32, %c0_i32_0 : i32, i32
  }
  func.func @transform_2(%arg0: i32) -> (i32, i32) {
    %c0_i32 = arith.constant 0 : i32
    %c0_i32_0 = arith.constant 0 : i32
    %c0_i32_1 = arith.constant 0 : i32
    return %c0_i32, %c0_i32_0 : i32, i32
  }
  func.func @transform_3(%arg0: i32) -> (i32, i32) {
    %c0_i32 = arith.constant 0 : i32
    %c0_i32_0 = arith.constant 0 : i32
    return %arg0, %c0_i32 : i32, i32
  }
}

</mosaic_0001>

<llo_original>
// kernel: tpu_custom_call.1
$region0: #{tpu_custom_call.1}
  #allocation0 [shape = 'u32[]', space=smem, size = 0x4, offset = 0x4, fixed_abs, tag = 'smem constant byte address 0x4 - core index']
  #allocation1 [shape = 'u32[144,128]{1,0:T(1,128)}', space=vmem, size = 0x12000, scoped, tag = 'internal scratch']
  %s0 = inlined_call_operand.hbm [shape: f32[256,256], index: 0, kind: input, shape index: {}]
  %s1 = inlined_call_operand.hbm [shape: f32[1,256], index: 1, kind: input, shape index: {}]
  %s2 = inlined_call_operand.hbm [shape: f32[1,256], index: 2, kind: input, shape index: {}]
  %s3 = inlined_call_operand.hbm [shape: f32[256,256], index: 3, kind: output, shape index: {}]
  %s4 = sld [smem:[#allocation0]]
  $region57: #{tpu_custom_call.1} parent=0
    _
  %s6 = ssub.s32 1, %s4
  %s7 = scalar_select 0, %s6, %s4
  $region1: #{tpu_custom_call.1} parent=0
    #allocation2 [shape = 'u8[262144]{0}', space=vmem, size = 0x40000, scoped, tag = 'input window, operand 0']
    #allocation3 [shape = 's32[2]{0}', space=sflag, size = 0x8, scoped, tag = 'scoped memory for tpu_custom_call.1']
    #allocation4 [shape = 's32[2]{0}', space=sflag, size = 0x8, scoped, tag = 'scoped memory for tpu_custom_call.1']
    #allocation5 [shape = 'u8[1024]{0}', space=vmem, size = 0x400, scoped, tag = 'input window, operand 1, single buffered']
    #allocation6 [shape = 's32[1]{0}', space=sflag, size = 0x4, scoped, tag = 'scoped memory for tpu_custom_call.1']
    #allocation7 [shape = 'u8[1024]{0}', space=vmem, size = 0x400, scoped, tag = 'input window, operand 2, single buffered']
    #allocation8 [shape = 'u8[262144]{0}', space=vmem, size = 0x40000, scoped, tag = 'output window, operand 0']
    %8 = vsyncpa [#allocation3], 0
    %s9 = scalar_lea.sflag [#allocation3], 1
    %10 = vsyncpa %s9, 0
    %11 = vsyncpa [#allocation6], 0
    %12 = vsyncpa [#allocation4], 0
    %s13 = scalar_lea.sflag [#allocation4], 1
    %14 = vsyncpa %s13, 0
    loop: start=0, step=1, limit=4
    $region2: #{tpu_custom_call.1} parent=1 // loop_pre_header
      _
    $region3: #{tpu_custom_call.1} parent=1 // loop_header
      %s16 = sphi 0, %s20
      %p17 = scmp.ge.s32.totalorder %s16, 4
      %s26 = sphi 0, %s28
      %s29 = sphi 0, %s26
      %s30 = sphi 0, %s29
      %s46 = sphi 0, %s30
      %s50 = sphi 0, %s50
      %s52 = sphi 0, %s50
      %s53 = sphi 0, %s52
      %s67 = sphi 0, %s53
      %s71 = sphi 0, %s71
      %s73 = sphi 0, %s71
      %s74 = sphi 0, %s73
      %s88 = sphi 0, %s74
      %s94 = sphi 0, %s96
      %s97 = sphi 0, %s94
      %s98 = sphi 0, %s97
      %s114 = sphi 0, %s98
    $region4: #{tpu_custom_call.1} parent=1 // loop_header_branch
      %19 = sbr.rel (%p17) target = $region8
    $region5: #{tpu_custom_call.1} parent=1 // loop_body
      %s21 = ssub.s32 %s16, 1
      %s22 = ssub.s32 %s16, 2
      %s23 = sadd.s32 %s16, 1
      %s24 = ssub.s32 %s16, %s23
      %p25 = scmp.eq.s32.totalorder %s24, 0
      %s27 = sadd.s32 %s26, 1
      %s28 = scalar_select %p25, %s26, %s27
      %p31 = pneg %p25
      %p32 = scmp.eq.s32.totalorder %s16, 1
      %p33 = por %p31, %p32
      %p34 = scmp.ne.s32.totalorder %s26, %s29
      %p35 = scmp.eq.s32.totalorder %s16, 0
      %p36 = por %p34, %p35
      %p37 = scmp.ne.s32.totalorder %s26, %s29
      %p38 = scmp.eq.s32.totalorder %s21, 1
      %p39 = por %p37, %p38
      %p40 = scmp.ne.s32.totalorder %s29, %s30
      %p41 = scmp.eq.s32.totalorder %s21, 0
      %p42 = por %p40, %p41
      %p43 = scmp.ne.s32.totalorder %s29, %s30
      %p44 = scmp.eq.s32.totalorder %s22, 1
      %p45 = por %p43, %p44
      %p47 = scmp.ne.s32.totalorder %s30, %s46
      %p48 = scmp.eq.s32.totalorder %s22, 0
      %p49 = por %p47, %p48
      %s51 = sadd.s32 %s50, 1
      %p54 = scmp.eq.s32.totalorder %s16, 1
      %p55 = scmp.ne.s32.totalorder %s50, %s52
      %p56 = scmp.eq.s32.totalorder %s16, 0
      %p57 = por %p55, %p56
      %p58 = scmp.ne.s32.totalorder %s50, %s52
      %p59 = scmp.eq.s32.totalorder %s21, 1
      %p60 = por %p58, %p59
      %p61 = scmp.ne.s32.totalorder %s52, %s53
      %p62 = scmp.eq.s32.totalorder %s21, 0
      %p63 = por %p61, %p62
      %p64 = scmp.ne.s32.totalorder %s52, %s53
      %p65 = scmp.eq.s32.totalorder %s22, 1
      %p66 = por %p64, %p65
      %p68 = scmp.ne.s32.totalorder %s53, %s67
      %p69 = scmp.eq.s32.totalorder %s22, 0
      %p70 = por %p68, %p69
      %s72 = sadd.s32 %s71, 1
      %p75 = scmp.eq.s32.totalorder %s16, 1
      %p76 = scmp.ne.s32.totalorder %s71, %s73
      %p77 = scmp.eq.s32.totalorder %s16, 0
      %p78 = por %p76, %p77
      %p79 = scmp.ne.s32.totalorder %s71, %s73
      %p80 = scmp.eq.s32.totalorder %s21, 1
      %p81 = por %p79, %p80
      %p82 = scmp.ne.s32.totalorder %s73, %s74
      %p83 = scmp.eq.s32.totalorder %s21, 0
      %p84 = por %p82, %p83
      %p85 = scmp.ne.s32.totalorder %s73, %s74
      %p86 = scmp.eq.s32.totalorder %s22, 1
      %p87 = por %p85, %p86
      %p89 = scmp.ne.s32.totalorder %s74, %s88
      %p90 = scmp.eq.s32.totalorder %s22, 0
      %p91 = por %p89, %p90
      %s92 = ssub.s32 %s16, %s23
      %p93 = scmp.eq.s32.totalorder %s92, 0
      %s95 = sadd.s32 %s94, 1
      %s96 = scalar_select %p93, %s94, %s95
      %p99 = pneg %p93
      %p100 = scmp.eq.s32.totalorder %s16, 1
      %p101 = por %p99, %p100
      %p102 = scmp.ne.s32.totalorder %s94, %s97
      %p103 = scmp.eq.s32.totalorder %s16, 0
      %p104 = por %p102, %p103
      %p105 = scmp.ne.s32.totalorder %s94, %s97
      %p106 = scmp.eq.s32.totalorder %s21, 1
      %p107 = por %p105, %p106
      %p108 = scmp.ne.s32.totalorder %s97, %s98
      %p109 = scmp.eq.s32.totalorder %s21, 0
      %p110 = por %p108, %p109
      %p111 = scmp.ne.s32.totalorder %s97, %s98
      %p112 = scmp.eq.s32.totalorder %s22, 1
      %p113 = por %p111, %p112
      %p115 = scmp.ne.s32.totalorder %s98, %s114
      %p116 = scmp.eq.s32.totalorder %s22, 0
      %p117 = por %p115, %p116
      %p118 = scmp.le.s32.totalorder 1, %s16
      %p119 = scmp.lt.s32.totalorder %s16, 3
      %p120 = pnand %p118, %p119
      %p121 = pneg %p120
      // Predicated region
      $region9: #{tpu_custom_call.1} parent=5 // pred_check
        _
      $region10: #{tpu_custom_call.1} parent=5 // pred_check_branch
        %123 = sbr.rel (%p120) target = $region12
      $region11: #{tpu_custom_call.1} parent=5 // pred_region
        %s124 = ssub.s32 %s16, 1
        // Predicated region
        $region13: #{tpu_custom_call.1} parent=11 // pred_check
          %p125 = pneg %p63
        $region14: #{tpu_custom_call.1} parent=11 // pred_check_branch
          %127 = sbr.rel (%p125) target = $region16
        $region15: #{tpu_custom_call.1} parent=11 // pred_region
          %s129 = ssub.s32 32, 32
          %130 = vsyncadd [#allocation6], %s129
          %s132 = sshll.u32 [#allocation5], 4
          %s133 = int_to_ptr.vmem [resolvable:$true] %s132
          %135 = dma.hbm_to_vmem [thread:$0]  %s1, 32, %s133, [#allocation6]
        $region16: #{tpu_custom_call.1} parent=11 // pred_fallthru
          _
        // Predicated region
        $region17: #{tpu_custom_call.1} parent=11 // pred_check
          %p136 = pneg %p84
        $region18: #{tpu_custom_call.1} parent=11 // pred_check_branch
          %138 = sbr.rel (%p136) target = $region20
        $region19: #{tpu_custom_call.1} parent=11 // pred_region
          %s140 = ssub.s32 32, 32
          %141 = vsyncadd [#allocation6], %s140
          %s143 = sshll.u32 [#allocation7], 4
          %s144 = int_to_ptr.vmem [resolvable:$true] %s143
          %146 = dma.hbm_to_vmem [thread:$0]  %s2, 32, %s144, [#allocation6]
        $region20: #{tpu_custom_call.1} parent=11 // pred_fallthru
          _
      $region12: #{tpu_custom_call.1} parent=5 // pred_fallthru
        _
      %p147 = scmp.lt.s32.totalorder %s16, 2
      // Predicated region
      $region21: #{tpu_custom_call.1} parent=5 // pred_check
        %p148 = pneg %p147
      $region22: #{tpu_custom_call.1} parent=5 // pred_check_branch
        %150 = sbr.rel (%p148) target = $region24
      $region23: #{tpu_custom_call.1} parent=5 // pred_region
        // Predicated region
        $region25: #{tpu_custom_call.1} parent=23 // pred_check
          %p151 = pneg %p36
        $region26: #{tpu_custom_call.1} parent=23 // pred_check_branch
          %153 = sbr.rel (%p151) target = $region28
        $region27: #{tpu_custom_call.1} parent=23 // pred_region
          %s154 = sand.u32 %s26, 1
          %s155 = scalar_lea.sflag [#allocation3], %s154
          %s156 = sand.u32 %s26, 1
          %s157 = smul.addr %s156, 256
          %s158 = scalar_lea.vmem [#allocation2], %s157
          %s159 = smul.u32 16, %s16
          %s161 = ssub.s32 4096, 4096
          %162 = vsyncadd %s155, %s161
          %s163 = smul.addr %s159, 2
          %s164 = smul.addr %s163, 128
          %s165 = scalar_lea.hbm %s0, %s164
          %s166 = sshll.u32 %s158, 4
          %s167 = int_to_ptr.vmem [resolvable:$true] %s166
          %172 = dma.hbm_to_vmem [thread:$0]  %s165, 4096, %s167, %s155, 256, 256, 16
        $region28: #{tpu_custom_call.1} parent=23 // pred_fallthru
          _
      $region24: #{tpu_custom_call.1} parent=5 // pred_fallthru
        _
      %p173 = scmp.le.s32.totalorder 1, %s16
      %p174 = scmp.lt.s32.totalorder %s16, 3
      %p175 = pnand %p173, %p174
      %p176 = pneg %p175
      // Predicated region
      $region29: #{tpu_custom_call.1} parent=5 // pred_check
        _
      $region30: #{tpu_custom_call.1} parent=5 // pred_check_branch
        %178 = sbr.rel (%p175) target = $region32
      $region31: #{tpu_custom_call.1} parent=5 // pred_region
        %s179 = ssub.s32 %s16, 1
        %s180 = sand.u32 %s29, 1
        %s181 = scalar_lea.sflag [#allocation3], %s180
        %s182 = sand.u32 %s29, 1
        %s183 = smul.addr %s182, 256
        %s184 = scalar_lea.vmem [#allocation2], %s183
        // Predicated region
        $region33: #{tpu_custom_call.1} parent=31 // pred_check
          %p185 = pneg %p42
        $region34: #{tpu_custom_call.1} parent=31 // pred_check_branch
          %187 = sbr.rel (%p185) target = $region36
        $region35: #{tpu_custom_call.1} parent=31 // pred_region
          %188 = dma.done %s181, 4096
        $region36: #{tpu_custom_call.1} parent=31 // pred_fallthru
          _
        // Predicated region
        $region37: #{tpu_custom_call.1} parent=31 // pred_check
          %p189 = pneg %p63
        $region38: #{tpu_custom_call.1} parent=31 // pred_check_branch
          %191 = sbr.rel (%p189) target = $region40
        $region39: #{tpu_custom_call.1} parent=31 // pred_region
          %192 = dma.done [#allocation6], 32
        $region40: #{tpu_custom_call.1} parent=31 // pred_fallthru
          _
        // Predicated region
        $region41: #{tpu_custom_call.1} parent=31 // pred_check
          %p193 = pneg %p84
        $region42: #{tpu_custom_call.1} parent=31 // pred_check_branch
          %195 = sbr.rel (%p193) target = $region44
        $region43: #{tpu_custom_call.1} parent=31 // pred_region
          %196 = dma.done [#allocation6], 32
        $region44: #{tpu_custom_call.1} parent=31 // pred_fallthru
          _
        %s197 = sand.u32 %s29, 1
        %s198 = scalar_lea.sflag [#allocation3], %s197
        %s199 = sand.u32 %s29, 1
        %s200 = smul.addr %s199, 256
        %s201 = scalar_lea.vmem [#allocation2], %s200
        %p202 = pneg %p42
        %p203 = pneg %p39
        %p204 = pneg %p63
        %p205 = pneg %p60
        %p206 = pneg %p84
        %p207 = pneg %p81
        %p208 = pneg %p110
        %p209 = pneg %p107
        %s210 = sand.u32 %s97, 1
        %s211 = scalar_lea.sflag [#allocation4], %s210
        %s212 = sand.u32 %s97, 1
        %s213 = smul.addr %s212, 256
        %s214 = scalar_lea.vmem [#allocation8], %s213
        %s215 = smul.u32 16, %s21
        %s216 = smul.u32 16, %s21
        %v217 = vld [vmem:[%s184] sm:$0xff]
        %v218 = vld [vmem:[%s184 + $0x8] sm:$0xff]
        %v219 = vld [vmem:[%s184 + $0x10] sm:$0xff]
        %v220 = vld [vmem:[%s184 + $0x18] sm:$0xff]
        %v221 = vld [vmem:[%s184 + $0x20] sm:$0xff]
        %v222 = vld [vmem:[%s184 + $0x28] sm:$0xff]
        %v223 = vld [vmem:[%s184 + $0x30] sm:$0xff]
        %v224 = vld [vmem:[%s184 + $0x38] sm:$0xff]
        %v225 = vld [vmem:[%s184 + $0x40] sm:$0xff]
        %v226 = vld [vmem:[%s184 + $0x48] sm:$0xff]
        %v227 = vld [vmem:[%s184 + $0x50] sm:$0xff]
        %v228 = vld [vmem:[%s184 + $0x58] sm:$0xff]
        %v229 = vld [vmem:[%s184 + $0x60] sm:$0xff]
        %v230 = vld [vmem:[%s184 + $0x68] sm:$0xff]
        %v231 = vld [vmem:[%s184 + $0x70] sm:$0xff]
        %v232 = vld [vmem:[%s184 + $0x78] sm:$0xff]
        %v233 = vld [vmem:[%s184 + $0x80] sm:$0xff]
        %v234 = vld [vmem:[%s184 + $0x88] sm:$0xff]
        %v235 = vld [vmem:[%s184 + $0x90] sm:$0xff]
        %v236 = vld [vmem:[%s184 + $0x98] sm:$0xff]
        %v237 = vld [vmem:[%s184 + $0xa0] sm:$0xff]
        %v238 = vld [vmem:[%s184 + $0xa8] sm:$0xff]
        %v239 = vld [vmem:[%s184 + $0xb0] sm:$0xff]
        %v240 = vld [vmem:[%s184 + $0xb8] sm:$0xff]
        %v241 = vld [vmem:[%s184 + $0xc0] sm:$0xff]
        %v242 = vld [vmem:[%s184 + $0xc8] sm:$0xff]
        %v243 = vld [vmem:[%s184 + $0xd0] sm:$0xff]
        %v244 = vld [vmem:[%s184 + $0xd8] sm:$0xff]
        %v245 = vld [vmem:[%s184 + $0xe0] sm:$0xff]
        %v246 = vld [vmem:[%s184 + $0xe8] sm:$0xff]
        %v247 = vld [vmem:[%s184 + $0xf0] sm:$0xff]
        %v248 = vld [vmem:[%s184 + $0xf8] sm:$0xff]
        %v249 = vadd.f32 %v217, %v218
        %250 = vadd.xlane.f32.xlu0 %v249
        %v251 = vpop.xlane.xlu0 %250
        %v252 = vadd.f32 %v219, %v220
        %253 = vadd.xlane.f32.xlu0 %v252
        %v254 = vpop.xlane.xlu0 %253
        %v255 = vadd.f32 %v221, %v222
        %256 = vadd.xlane.f32.xlu0 %v255
        %v257 = vpop.xlane.xlu0 %256
        %v258 = vadd.f32 %v223, %v224
        %259 = vadd.xlane.f32.xlu0 %v258
        %v260 = vpop.xlane.xlu0 %259
        %v261 = vadd.f32 %v225, %v226
        %262 = vadd.xlane.f32.xlu0 %v261
        %v263 = vpop.xlane.xlu0 %262
        %v264 = vadd.f32 %v227, %v228
        %265 = vadd.xlane.f32.xlu0 %v264
        %v266 = vpop.xlane.xlu0 %265
        %v267 = vadd.f32 %v229, %v230
        %268 = vadd.xlane.f32.xlu0 %v267
        %v269 = vpop.xlane.xlu0 %268
        %v270 = vadd.f32 %v231, %v232
        %271 = vadd.xlane.f32.xlu0 %v270
        %v272 = vpop.xlane.xlu0 %271
        %v273 = vadd.f32 %v233, %v234
        %274 = vadd.xlane.f32.xlu0 %v273
        %v275 = vpop.xlane.xlu0 %274
        %v276 = vadd.f32 %v235, %v236
        %277 = vadd.xlane.f32.xlu0 %v276
        %v278 = vpop.xlane.xlu0 %277
        %v279 = vadd.f32 %v237, %v238
        %280 = vadd.xlane.f32.xlu0 %v279
        %v281 = vpop.xlane.xlu0 %280
        %v282 = vadd.f32 %v239, %v240
        %283 = vadd.xlane.f32.xlu0 %v282
        %v284 = vpop.xlane.xlu0 %283
        %v285 = vadd.f32 %v241, %v242
        %286 = vadd.xlane.f32.xlu0 %v285
        %v287 = vpop.xlane.xlu0 %286
        %v288 = vadd.f32 %v243, %v244
        %289 = vadd.xlane.f32.xlu0 %v288
        %v290 = vpop.xlane.xlu0 %289
        %v291 = vadd.f32 %v245, %v246
        %292 = vadd.xlane.f32.xlu0 %v291
        %v293 = vpop.xlane.xlu0 %292
        %v294 = vadd.f32 %v247, %v248
        %295 = vadd.xlane.f32.xlu0 %v294
        %v296 = vpop.xlane.xlu0 %295
        %v297 = vrcp.pop 256.0
        %v298 = vmul.f32 %v251, %v297
        %v299 = vmul.f32 %v254, %v297
        %v300 = vmul.f32 %v257, %v297
        %v301 = vmul.f32 %v260, %v297
        %v302 = vmul.f32 %v263, %v297
        %v303 = vmul.f32 %v266, %v297
        %v304 = vmul.f32 %v269, %v297
        %v305 = vmul.f32 %v272, %v297
        %v306 = vmul.f32 %v275, %v297
        %v307 = vmul.f32 %v278, %v297
        %v308 = vmul.f32 %v281, %v297
        %v309 = vmul.f32 %v284, %v297
        %v310 = vmul.f32 %v287, %v297
        %v311 = vmul.f32 %v290, %v297
        %v312 = vmul.f32 %v293, %v297
        %v313 = vmul.f32 %v296, %v297
        %v314 = vsub.f32 %v217, %v298
        %v315 = vsub.f32 %v218, %v298
        %v316 = vsub.f32 %v219, %v299
        %v317 = vsub.f32 %v220, %v299
        %v318 = vsub.f32 %v221, %v300
        %v319 = vsub.f32 %v222, %v300
        %v320 = vsub.f32 %v223, %v301
        %v321 = vsub.f32 %v224, %v301
        %v322 = vsub.f32 %v225, %v302
        %v323 = vsub.f32 %v226, %v302
        %v324 = vsub.f32 %v227, %v303
        %v325 = vsub.f32 %v228, %v303
        %v326 = vsub.f32 %v229, %v304
        %v327 = vsub.f32 %v230, %v304
        %v328 = vsub.f32 %v231, %v305
        %v329 = vsub.f32 %v232, %v305
        %v330 = vsub.f32 %v233, %v306
        %v331 = vsub.f32 %v234, %v306
        %v332 = vsub.f32 %v235, %v307
        %v333 = vsub.f32 %v236, %v307
        %v334 = vsub.f32 %v237, %v308
        %v335 = vsub.f32 %v238, %v308
        %v336 = vsub.f32 %v239, %v309
        %v337 = vsub.f32 %v240, %v309
        %v338 = vsub.f32 %v241, %v310
        %v339 = vsub.f32 %v242, %v310
        %v340 = vsub.f32 %v243, %v311
        %v341 = vsub.f32 %v244, %v311
        %v342 = vsub.f32 %v245, %v312
        %v343 = vsub.f32 %v246, %v312
        %v344 = vsub.f32 %v247, %v313
        %v345 = vsub.f32 %v248, %v313
        %v346 = vmul.f32 %v314, %v314
        %v347 = vmul.f32 %v315, %v315
        %v348 = vmul.f32 %v316, %v316
        %v349 = vmul.f32 %v317, %v317
        %v350 = vmul.f32 %v318, %v318
        %v351 = vmul.f32 %v319, %v319
        %v352 = vmul.f32 %v320, %v320
        %v353 = vmul.f32 %v321, %v321
        %v354 = vmul.f32 %v322, %v322
        %v355 = vmul.f32 %v323, %v323
        %v356 = vmul.f32 %v324, %v324
        %v357 = vmul.f32 %v325, %v325
        %v358 = vmul.f32 %v326, %v326
        %v359 = vmul.f32 %v327, %v327
        %v360 = vmul.f32 %v328, %v328
        %v361 = vmul.f32 %v329, %v329
        %v362 = vmul.f32 %v330, %v330
        %v363 = vmul.f32 %v331, %v331
        %v364 = vmul.f32 %v332, %v332
        %v365 = vmul.f32 %v333, %v333
        %v366 = vmul.f32 %v334, %v334
        %v367 = vmul.f32 %v335, %v335
        %v368 = vmul.f32 %v336, %v336
        %v369 = vmul.f32 %v337, %v337
        %v370 = vmul.f32 %v338, %v338
        %v371 = vmul.f32 %v339, %v339
        %v372 = vmul.f32 %v340, %v340
        %v373 = vmul.f32 %v341, %v341
        %v374 = vmul.f32 %v342, %v342
        %v375 = vmul.f32 %v343, %v343
        %v376 = vmul.f32 %v344, %v344
        %v377 = vmul.f32 %v345, %v345
        %v378 = vadd.f32 %v346, %v347
        %379 = vadd.xlane.f32.xlu0 %v378
        %v380 = vpop.xlane.xlu0 %379
        %v381 = vadd.f32 %v348, %v349
        %382 = vadd.xlane.f32.xlu0 %v381
        %v383 = vpop.xlane.xlu0 %382
        %v384 = vadd.f32 %v350, %v351
        %385 = vadd.xlane.f32.xlu0 %v384
        %v386 = vpop.xlane.xlu0 %385
        %v387 = vadd.f32 %v352, %v353
        %388 = vadd.xlane.f32.xlu0 %v387
        %v389 = vpop.xlane.xlu0 %388
        %v390 = vadd.f32 %v354, %v355
        %391 = vadd.xlane.f32.xlu0 %v390
        %v392 = vpop.xlane.xlu0 %391
        %v393 = vadd.f32 %v356, %v357
        %394 = vadd.xlane.f32.xlu0 %v393
        %v395 = vpop.xlane.xlu0 %394
        %v396 = vadd.f32 %v358, %v359
        %397 = vadd.xlane.f32.xlu0 %v396
        %v398 = vpop.xlane.xlu0 %397
        %v399 = vadd.f32 %v360, %v361
        %400 = vadd.xlane.f32.xlu0 %v399
        %v401 = vpop.xlane.xlu0 %400
        %v402 = vadd.f32 %v362, %v363
        %403 = vadd.xlane.f32.xlu0 %v402
        %v404 = vpop.xlane.xlu0 %403
        %v405 = vadd.f32 %v364, %v365
        %406 = vadd.xlane.f32.xlu0 %v405
        %v407 = vpop.xlane.xlu0 %406
        %v408 = vadd.f32 %v366, %v367
        %409 = vadd.xlane.f32.xlu0 %v408
        %v410 = vpop.xlane.xlu0 %409
        %v411 = vadd.f32 %v368, %v369
        %412 = vadd.xlane.f32.xlu0 %v411
        %v413 = vpop.xlane.xlu0 %412
        %v414 = vadd.f32 %v370, %v371
        %415 = vadd.xlane.f32.xlu0 %v414
        %v416 = vpop.xlane.xlu0 %415
        %v417 = vadd.f32 %v372, %v373
        %418 = vadd.xlane.f32.xlu0 %v417
        %v419 = vpop.xlane.xlu0 %418
        %v420 = vadd.f32 %v374, %v375
        %421 = vadd.xlane.f32.xlu0 %v420
        %v422 = vpop.xlane.xlu0 %421
        %v423 = vadd.f32 %v376, %v377
        %424 = vadd.xlane.f32.xlu0 %v423
        %v425 = vpop.xlane.xlu0 %424
        %v426 = vmul.f32 %v380, %v297
        %v427 = vmul.f32 %v383, %v297
        %v428 = vmul.f32 %v386, %v297
        %v429 = vmul.f32 %v389, %v297
        %v430 = vmul.f32 %v392, %v297
        %v431 = vmul.f32 %v395, %v297
        %v432 = vmul.f32 %v398, %v297
        %v433 = vmul.f32 %v401, %v297
        %v434 = vmul.f32 %v404, %v297
        %v435 = vmul.f32 %v407, %v297
        %v436 = vmul.f32 %v410, %v297
        %v437 = vmul.f32 %v413, %v297
        %v438 = vmul.f32 %v416, %v297
        %v439 = vmul.f32 %v419, %v297
        %v440 = vmul.f32 %v422, %v297
        %v441 = vmul.f32 %v425, %v297
        %v442 = vadd.f32 %v426, 1e-05
        %v443 = vadd.f32 %v427, 1e-05
        %v444 = vadd.f32 %v428, 1e-05
        %v445 = vadd.f32 %v429, 1e-05
        %v446 = vadd.f32 %v430, 1e-05
        %v447 = vadd.f32 %v431, 1e-05
        %v448 = vadd.f32 %v432, 1e-05
        %v449 = vadd.f32 %v433, 1e-05
        %v450 = vadd.f32 %v434, 1e-05
        %v451 = vadd.f32 %v435, 1e-05
        %v452 = vadd.f32 %v436, 1e-05
        %v453 = vadd.f32 %v437, 1e-05
        %v454 = vadd.f32 %v438, 1e-05
        %v455 = vadd.f32 %v439, 1e-05
        %v456 = vadd.f32 %v440, 1e-05
        %v457 = vadd.f32 %v441, 1e-05
        %v458 = vrsqrt.pop %v442
        %v459 = vrsqrt.pop %v443
        %v460 = vrsqrt.pop %v444
        %v461 = vrsqrt.pop %v445
        %v462 = vrsqrt.pop %v446
        %v463 = vrsqrt.pop %v447
        %v464 = vrsqrt.pop %v448
        %v465 = vrsqrt.pop %v449
        %v466 = vrsqrt.pop %v450
        %v467 = vrsqrt.pop %v451
        %v468 = vrsqrt.pop %v452
        %v469 = vrsqrt.pop %v453
        %v470 = vrsqrt.pop %v454
        %v471 = vrsqrt.pop %v455
        %v472 = vrsqrt.pop %v456
        %v473 = vrsqrt.pop %v457
        %v474 = vmul.f32 %v314, %v458
        %v475 = vmul.f32 %v315, %v458
        %v476 = vmul.f32 %v316, %v459
        %v477 = vmul.f32 %v317, %v459
        %v478 = vmul.f32 %v318, %v460
        %v479 = vmul.f32 %v319, %v460
        %v480 = vmul.f32 %v320, %v461
        %v481 = vmul.f32 %v321, %v461
        %v482 = vmul.f32 %v322, %v462
        %v483 = vmul.f32 %v323, %v462
        %v484 = vmul.f32 %v324, %v463
        %v485 = vmul.f32 %v325, %v463
        %v486 = vmul.f32 %v326, %v464
        %v487 = vmul.f32 %v327, %v464
        %v488 = vmul.f32 %v328, %v465
        %v489 = vmul.f32 %v329, %v465
        %v490 = vmul.f32 %v330, %v466
        %v491 = vmul.f32 %v331, %v466
        %v492 = vmul.f32 %v332, %v467
        %v493 = vmul.f32 %v333, %v467
        %v494 = vmul.f32 %v334, %v468
        %v495 = vmul.f32 %v335, %v468
        %v496 = vmul.f32 %v336, %v469
        %v497 = vmul.f32 %v337, %v469
        %v498 = vmul.f32 %v338, %v470
        %v499 = vmul.f32 %v339, %v470
        %v500 = vmul.f32 %v340, %v471
        %v501 = vmul.f32 %v341, %v471
        %v502 = vmul.f32 %v342, %v472
        %v503 = vmul.f32 %v343, %v472
        %v504 = vmul.f32 %v344, %v473
        %v505 = vmul.f32 %v345, %v473
        %v506 = vld [vmem:[#allocation5] sm:$0x3]
        %v508 = vlaneseq
        %v509 = vshrl.u32 %v508, 7
        %v510 = vsub.s32 0, %v509
        %v511 = vrot.slane %v506, %v510
        %v512 = vlaneseq
        %v513 = vshrl.u32 %v512, 7
        %v514 = vsub.s32 1, %v513
        %v515 = vrot.slane %v506, %v514
        %v518 = vmul.f32 %v474, %v511
        %v519 = vmul.f32 %v475, %v515
        %v520 = vmul.f32 %v476, %v511
        %v521 = vmul.f32 %v477, %v515
        %v522 = vmul.f32 %v478, %v511
        %v523 = vmul.f32 %v479, %v515
        %v524 = vmul.f32 %v480, %v511
        %v525 = vmul.f32 %v481, %v515
        %v526 = vmul.f32 %v482, %v511
        %v527 = vmul.f32 %v483, %v515
        %v528 = vmul.f32 %v484, %v511
        %v529 = vmul.f32 %v485, %v515
        %v530 = vmul.f32 %v486, %v511
        %v531 = vmul.f32 %v487, %v515
        %v532 = vmul.f32 %v488, %v511
        %v533 = vmul.f32 %v489, %v515
        %v534 = vmul.f32 %v490, %v511
        %v535 = vmul.f32 %v491, %v515
        %v536 = vmul.f32 %v492, %v511
        %v537 = vmul.f32 %v493, %v515
        %v538 = vmul.f32 %v494, %v511
        %v539 = vmul.f32 %v495, %v515
        %v540 = vmul.f32 %v496, %v511
        %v541 = vmul.f32 %v497, %v515
        %v542 = vmul.f32 %v498, %v511
        %v543 = vmul.f32 %v499, %v515
        %v544 = vmul.f32 %v500, %v511
        %v545 = vmul.f32 %v501, %v515
        %v546 = vmul.f32 %v502, %v511
        %v547 = vmul.f32 %v503, %v515
        %v548 = vmul.f32 %v504, %v511
        %v549 = vmul.f32 %v505, %v515
        %v550 = vld [vmem:[#allocation7] sm:$0x3]
        %v552 = vlaneseq
        %v553 = vshrl.u32 %v552, 7
        %v554 = vsub.s32 0, %v553
        %v555 = vrot.slane %v550, %v554
        %v556 = vlaneseq
        %v557 = vshrl.u32 %v556, 7
        %v558 = vsub.s32 1, %v557
        %v559 = vrot.slane %v550, %v558
        %v562 = vadd.f32 %v518, %v555
        %v563 = vadd.f32 %v519, %v559
        %v564 = vadd.f32 %v520, %v555
        %v565 = vadd.f32 %v521, %v559
        %v566 = vadd.f32 %v522, %v555
        %v567 = vadd.f32 %v523, %v559
        %v568 = vadd.f32 %v524, %v555
        %v569 = vadd.f32 %v525, %v559
        %v570 = vadd.f32 %v526, %v555
        %v571 = vadd.f32 %v527, %v559
        %v572 = vadd.f32 %v528, %v555
        %v573 = vadd.f32 %v529, %v559
        %v574 = vadd.f32 %v530, %v555
        %v575 = vadd.f32 %v531, %v559
        %v576 = vadd.f32 %v532, %v555
        %v577 = vadd.f32 %v533, %v559
        %v578 = vadd.f32 %v534, %v555
        %v579 = vadd.f32 %v535, %v559
        %v580 = vadd.f32 %v536, %v555
        %v581 = vadd.f32 %v537, %v559
        %v582 = vadd.f32 %v538, %v555
        %v583 = vadd.f32 %v539, %v559
        %v584 = vadd.f32 %v540, %v555
        %v585 = vadd.f32 %v541, %v559
        %v586 = vadd.f32 %v542, %v555
        %v587 = vadd.f32 %v543, %v559
        %v588 = vadd.f32 %v544, %v555
        %v589 = vadd.f32 %v545, %v559
        %v590 = vadd.f32 %v546, %v555
        %v591 = vadd.f32 %v547, %v559
        %v592 = vadd.f32 %v548, %v555
        %v593 = vadd.f32 %v549, %v559
        %594 = vst [vmem:[%s214] sm:$0xff] %v562
        %595 = vst [vmem:[%s214 + $0x8] sm:$0xff] %v563
        %596 = vst [vmem:[%s214 + $0x10] sm:$0xff] %v564
        %597 = vst [vmem:[%s214 + $0x18] sm:$0xff] %v565
        %598 = vst [vmem:[%s214 + $0x20] sm:$0xff] %v566
        %599 = vst [vmem:[%s214 + $0x28] sm:$0xff] %v567
        %600 = vst [vmem:[%s214 + $0x30] sm:$0xff] %v568
        %601 = vst [vmem:[%s214 + $0x38] sm:$0xff] %v569
        %602 = vst [vmem:[%s214 + $0x40] sm:$0xff] %v570
        %603 = vst [vmem:[%s214 + $0x48] sm:$0xff] %v571
        %604 = vst [vmem:[%s214 + $0x50] sm:$0xff] %v572
        %605 = vst [vmem:[%s214 + $0x58] sm:$0xff] %v573
        %606 = vst [vmem:[%s214 + $0x60] sm:$0xff] %v574
        %607 = vst [vmem:[%s214 + $0x68] sm:$0xff] %v575
        %608 = vst [vmem:[%s214 + $0x70] sm:$0xff] %v576
        %609 = vst [vmem:[%s214 + $0x78] sm:$0xff] %v577
        %610 = vst [vmem:[%s214 + $0x80] sm:$0xff] %v578
        %611 = vst [vmem:[%s214 + $0x88] sm:$0xff] %v579
        %612 = vst [vmem:[%s214 + $0x90] sm:$0xff] %v580
        %613 = vst [vmem:[%s214 + $0x98] sm:$0xff] %v581
        %614 = vst [vmem:[%s214 + $0xa0] sm:$0xff] %v582
        %615 = vst [vmem:[%s214 + $0xa8] sm:$0xff] %v583
        %616 = vst [vmem:[%s214 + $0xb0] sm:$0xff] %v584
        %617 = vst [vmem:[%s214 + $0xb8] sm:$0xff] %v585
        %618 = vst [vmem:[%s214 + $0xc0] sm:$0xff] %v586
        %619 = vst [vmem:[%s214 + $0xc8] sm:$0xff] %v587
        %620 = vst [vmem:[%s214 + $0xd0] sm:$0xff] %v588
        %621 = vst [vmem:[%s214 + $0xd8] sm:$0xff] %v589
        %622 = vst [vmem:[%s214 + $0xe0] sm:$0xff] %v590
        %623 = vst [vmem:[%s214 + $0xe8] sm:$0xff] %v591
        %624 = vst [vmem:[%s214 + $0xf0] sm:$0xff] %v592
        %625 = vst [vmem:[%s214 + $0xf8] sm:$0xff] %v593
        %s626 = sand.u32 %s97, 1
        %s627 = scalar_lea.sflag [#allocation4], %s626
        %s628 = sand.u32 %s97, 1
        %s629 = smul.addr %s628, 256
        %s630 = scalar_lea.vmem [#allocation8], %s629
        // Predicated region
        $region45: #{tpu_custom_call.1} parent=31 // pred_check
          %p631 = pneg %p107
        $region46: #{tpu_custom_call.1} parent=31 // pred_check_branch
          %633 = sbr.rel (%p631) target = $region48
        $region47: #{tpu_custom_call.1} parent=31 // pred_region
          %s634 = smul.u32 16, %s21
          %s636 = ssub.s32 4096, 4096
          %637 = vsyncadd %s627, %s636
          %s638 = smul.addr %s634, 2
          %s639 = smul.addr %s638, 128
          %s640 = scalar_lea.hbm %s3, %s639
          %s641 = sshll.u32 %s630, 4
          %s642 = int_to_ptr.vmem [resolvable:$true] %s641
          %647 = dma.vmem_to_hbm [thread:$0]  %s642, 4096, %s640, %s627, 256, 256, 16
        $region48: #{tpu_custom_call.1} parent=31 // pred_fallthru
          _
      $region32: #{tpu_custom_call.1} parent=5 // pred_fallthru
        _
      %p648 = scmp.le.s32.totalorder 2, %s16
      // Predicated region
      $region49: #{tpu_custom_call.1} parent=5 // pred_check
        %p649 = pneg %p648
      $region50: #{tpu_custom_call.1} parent=5 // pred_check_branch
        %651 = sbr.rel (%p649) target = $region52
      $region51: #{tpu_custom_call.1} parent=5 // pred_region
        %s652 = ssub.s32 %s16, 2
        // Predicated region
        $region53: #{tpu_custom_call.1} parent=51 // pred_check
          %p653 = pneg %p113
        $region54: #{tpu_custom_call.1} parent=51 // pred_check_branch
          %655 = sbr.rel (%p653) target = $region56
        $region55: #{tpu_custom_call.1} parent=51 // pred_region
          %s656 = sand.u32 %s98, 1
          %s657 = scalar_lea.sflag [#allocation4], %s656
          %s658 = sand.u32 %s98, 1
          %s659 = smul.addr %s658, 256
          %s660 = scalar_lea.vmem [#allocation8], %s659
          %661 = dma.done %s657, 4096
        $region56: #{tpu_custom_call.1} parent=51 // pred_fallthru
          _
      $region52: #{tpu_custom_call.1} parent=5 // pred_fallthru
        _
    $region6: #{tpu_custom_call.1} parent=1 // loop_footer
      %s20 = sadd.s32 1, %s16
    $region7: #{tpu_custom_call.1} parent=1 // loop_footer_branch
      %15 = sbr.rel target = $region3
    $region8: #{tpu_custom_call.1} parent=1 // loop_exit
      _
    %662 = vsyncpa [#allocation3], 1
    %s663 = scalar_lea.sflag [#allocation3], 1
    %664 = vsyncpa %s663, 1
    %665 = vsyncpa [#allocation6], 1
    %666 = vsyncpa [#allocation4], 1
    %s667 = scalar_lea.sflag [#allocation4], 1
    %668 = vsyncpa %s667, 1

</llo_original>
